<compile_context>
chip_gen: v7x
topology: tpu7x:2x2x1
jax: 0.10.0
libtpu: 0.0.40
codegen_flags: <defaults>
</compile_context>

<pallas_src>
import functools

import jax
import jax.numpy as jnp
from jax.experimental import pallas as pl
from jax.experimental.pallas import tpu as pltpu


def _round_up(x, m):
    return int(m * pl.cdiv(x, m))


def _vade_forward_kernel(
    x_ref, eps_ref,
    w1_ref, b1_ref,
    wh_ref, bh_ref,
    wd1_ref, bd1_ref,
    wd2_ref, bd2_ref,
    xrec_ref, lat_ref,
    *, lpad,
):
    x = x_ref[...]          # [TB, D_in] bf16 (cast on host; MXU operand only)
    eps = eps_ref[...]      # [TB, L_pad] f32 (padded cols are zero)

    # ----- encoder: Linear(D_in, H) -> ReLU (bf16 MXU inputs, f32 acc) -----
    h = jnp.dot(x, w1_ref[...], preferred_element_type=jnp.float32) + b1_ref[...]
    h = jnp.maximum(h, 0.0)

    # ----- fused (mu | logvar) head: one [H, 2*L_pad] matmul -----
    # Columns are laid out [mu(0:L) | pad | logvar(L_pad:L_pad+L) | pad] so the
    # two slices below are 128-lane aligned (no intra-vreg lane selects).
    head = jnp.dot(h.astype(jnp.bfloat16), wh_ref[...],
                   preferred_element_type=jnp.float32) + bh_ref[...]
    mu = head[:, :lpad]
    logvar = head[:, lpad:]

    # ----- reparameterization trick (f32 elementwise, exp on EUP) -----
    # Padded latent columns / padded batch rows see logvar == 0 (zero-padded
    # weights & bias), so exp() stays finite there; those rows/cols are sliced
    # off in the wrapper and never reduced over inside the kernel.
    z = mu + eps * jnp.exp(0.5 * logvar)

    # ----- decoder: Linear(L, H) -> ReLU -> Linear(H, D_in) -----
    hd = jnp.dot(z.astype(jnp.bfloat16), wd1_ref[...],
                 preferred_element_type=jnp.float32) + bd1_ref[...]
    hd = jnp.maximum(hd, 0.0)
    x_recon = jnp.dot(hd.astype(jnp.bfloat16), wd2_ref[...],
                      preferred_element_type=jnp.float32) + bd2_ref[...]

    # bf16 writeback halves the dominant output HBM stream.
    xrec_ref[...] = x_recon.astype(xrec_ref.dtype)
    # Packed lane-dense latent slab [mu | logvar | z]: two direct stores
    # (no concatenate copy), both 128-lane aligned.
    lat_ref[:, :2 * lpad] = head
    lat_ref[:, 2 * lpad:] = z


def _vmem_capacity_bytes():
    try:
        info = pltpu.get_tpu_info()
        cap = int(getattr(info, "vmem_capacity_bytes", 128 * 1024 * 1024))
        if cap > 0:
            return cap
    except Exception:
        pass
    return 128 * 1024 * 1024


def _pick_batch_tile(b, vmem_cap):
    # 256-row tiles fill the v6e MXU; cap at 128 on small-VMEM chips (v7x has
    # 64 MiB/TC) and on v5e-class MXUs there is no gain from 256 anyway.
    tb = 256 if vmem_cap >= (96 << 20) else 128
    if b < tb:
        tb = max(8, int(pl.next_power_of_2(b)))
    # If the batch grid would have a single step but the batch is big enough,
    # halve the tile so the 'parallel' axis can shard across v7x's 2 TCs.
    while pl.cdiv(b, tb) == 1 and tb >= 16 and b > 8:
        tb //= 2
    return max(8, tb)


def vade_forward(x_nchw, eps, params):
    """Forward pass of DeepEmbedding. Returns (x_recon, mu, logvar, z)."""
    B, C, H, W = x_nchw.shape
    d_in = C * H * W
    hidden = params["w1"].shape[1]
    latent = params["w_mu"].shape[1]
    lpad = _round_up(latent, 128)          # lane-align mu/logvar/z slices

    vmem_cap = _vmem_capacity_bytes()
    tb = _pick_batch_tile(B, vmem_cap)
    b_pad = tb * pl.cdiv(B, tb)

    bf16 = jnp.bfloat16
    f32 = jnp.float32

    # bf16 x stream (only consumed by the bf16 MXU matmul -> numerically
    # identical to an in-kernel cast, half the HBM/VMEM traffic).
    x_flat = x_nchw.reshape(B, d_in).astype(bf16)
    eps_p = jnp.zeros((b_pad, lpad), f32).at[:B, :latent].set(eps.astype(f32))
    if b_pad != B:
        x_flat = jnp.pad(x_flat, ((0, b_pad - B), (0, 0)))

    # bf16 weights (single-buffered resident in VMEM); f32 biases.
    w1 = params["w1"].astype(bf16)
    b1 = params["b1"].astype(f32)
    # Fused, lane-padded (mu | logvar) head: columns [0:L]=w_mu, [lpad:lpad+L]=w_lv.
    w_head = jnp.zeros((hidden, 2 * lpad), bf16)
    w_head = w_head.at[:, :latent].set(params["w_mu"].astype(bf16))
    w_head = w_head.at[:, lpad:lpad + latent].set(params["w_lv"].astype(bf16))
    b_head = jnp.zeros((1, 2 * lpad), f32)
    b_head = b_head.at[:, :latent].set(params["b_mu"].astype(f32))
    b_head = b_head.at[:, lpad:lpad + latent].set(params["b_lv"].astype(f32))
    # Decoder first layer padded along the (zero) latent pad rows.
    wd1 = jnp.zeros((lpad, hidden), bf16).at[:latent, :].set(params["wd1"].astype(bf16))
    bd1 = params["bd1"].astype(f32)
    wd2 = params["wd2"].astype(bf16)
    bd2 = params["bd2"].astype(f32)

    grid = (b_pad // tb,)

    def batch_spec(last):
        return pl.BlockSpec((tb, last), lambda i: (i, 0))

    def resident(shape):
        # Constant index_map -> fetched once; single buffer halves weight VMEM.
        return pl.BlockSpec(shape, lambda i: (0, 0), pipeline_mode=pl.Buffered(1))

    in_specs = [
        batch_spec(d_in),                 # x (bf16)
        batch_spec(lpad),                 # eps (f32, lane-padded)
        resident((d_in, hidden)),         # w1
        resident((1, hidden)),            # b1
        resident((hidden, 2 * lpad)),     # w_head (mu | logvar, lane-padded)
        resident((1, 2 * lpad)),          # b_head
        resident((lpad, hidden)),         # wd1
        resident((1, hidden)),            # bd1
        resident((hidden, d_in)),         # wd2
        resident((1, d_in)),              # bd2
    ]
    out_specs = (
        batch_spec(d_in),                 # x_recon (flat, bf16)
        batch_spec(3 * lpad),             # packed [mu | logvar | z] (f32)
    )
    out_shapes = (
        jax.ShapeDtypeStruct((b_pad, d_in), bf16),
        jax.ShapeDtypeStruct((b_pad, 3 * lpad), f32),
    )

    # ---- VMEM budget: weights x1 buffer + batch-tile I/O x2 buffers + temps ----
    weight_bytes = (2 * (d_in * hidden + hidden * 2 * lpad + lpad * hidden + hidden * d_in)
                    + 4 * (2 * hidden + 2 * lpad + d_in))
    io_tile_bytes = 2 * (tb * d_in * 2        # x bf16, double-buffered
                         + tb * lpad * 4      # eps f32
                         + tb * d_in * 2      # x_recon bf16
                         + tb * 3 * lpad * 4)  # lat f32
    temp_bytes = 4 * tb * (hidden + 2 * lpad + lpad + hidden + d_in)  # h/head/z/hd/x_recon f32
    vmem_needed = int(1.25 * (weight_bytes + io_tile_bytes + temp_bytes))
    vmem_limit = max(32 * 1024 * 1024, vmem_needed)
    vmem_limit = min(vmem_limit, (vmem_cap * 3) // 4)

    flops = 2 * b_pad * (d_in * hidden + hidden * 2 * lpad
                         + lpad * hidden + hidden * d_in)
    bytes_accessed = (
        2 * (b_pad * d_in * 2)                                    # bf16 x + x_recon
        + 4 * (b_pad * lpad + b_pad * 3 * lpad)                   # f32 eps + lat slab
        + 2 * (d_in * hidden + hidden * 2 * lpad + lpad * hidden + hidden * d_in)  # bf16 weights
        + 4 * (2 * hidden + 2 * lpad + d_in)                      # f32 biases
    )
    cost = pl.CostEstimate(flops=int(flops),
                           transcendentals=int(b_pad * lpad),
                           bytes_accessed=int(bytes_accessed))

    kernel = functools.partial(_vade_forward_kernel, lpad=lpad)
    x_recon_flat, lat = pl.pallas_call(
        kernel,
        out_shape=out_shapes,
        grid=grid,
        in_specs=in_specs,
        out_specs=out_specs,
        compiler_params=pltpu.CompilerParams(
            dimension_semantics=("parallel",),
            vmem_limit_bytes=int(vmem_limit)),
        cost_estimate=cost,
    )(x_flat, eps_p, w1, b1, w_head, b_head, wd1, bd1, wd2, bd2)

    # TODO(synk): for very large d_in (resident w1+wd2 > v7x's 64 MiB), add a
    # K grid axis over d_in for the encoder matmul (f32 accumulator scratch +
    # pl.when init/finalize) and an N grid axis for the final decoder matmul
    # so w1/wd2 are streamed instead of fully resident; optionally fp8 weights
    # for those two layers on v7x.
    x_recon = x_recon_flat[:B].astype(f32).reshape(B, C, H, W)
    mu = lat[:B, :latent]
    logvar = lat[:B, lpad:lpad + latent]
    z = lat[:B, 2 * lpad:2 * lpad + latent]
    return x_recon, mu, logvar, z


def init_params(key, d_in, hidden, latent, n_clusters):
    """Deterministic parameter init (mirrors shapes implied by the module)."""
    ks = jax.random.split(key, 8)
    scale = 0.02
    params = {
        "w1":   scale * jax.random.normal(ks[0], (d_in, hidden), jnp.float32),
        "b1":   jnp.zeros((1, hidden), jnp.float32),
        "w_mu": scale * jax.random.normal(ks[1], (hidden, latent), jnp.float32),
        "b_mu": jnp.zeros((1, latent), jnp.float32),
        "w_lv": scale * jax.random.normal(ks[2], (hidden, latent), jnp.float32),
        "b_lv": jnp.zeros((1, latent), jnp.float32),
        "wd1":  scale * jax.random.normal(ks[3], (latent, hidden), jnp.float32),
        "bd1":  jnp.zeros((1, hidden), jnp.float32),
        "wd2":  scale * jax.random.normal(ks[4], (hidden, d_in), jnp.float32),
        "bd2":  jnp.zeros((1, d_in), jnp.float32),
        # VaDE cluster priors (nn.Parameter in the module; unused in forward()).
        "pi_prior":     jnp.ones((n_clusters,), jnp.float32) / n_clusters,
        "mu_prior":     jax.random.normal(ks[5], (n_clusters, latent), jnp.float32),
        "logvar_prior": jax.random.normal(ks[6], (n_clusters, latent), jnp.float32),
    }
    return params


if __name__ == "__main__":
    key = jax.random.PRNGKey(0)
    B, C, H, W = 2, 4, 16, 16
    hidden, latent, n_clusters = 32, 16, 10
    d_in = C * H * W

    k_x, k_eps, k_p = jax.random.split(key, 3)
    x = jax.random.normal(k_x, (B, C, H, W), jnp.float32)
    eps = jax.random.normal(k_eps, (B, latent), jnp.float32)  # reparam noise
    params = init_params(k_p, d_in, hidden, latent, n_clusters)

    x_recon, mu, logvar, z = vade_forward(x, eps, params)
    jax.block_until_ready((x_recon, mu, logvar, z))

    # ---- reference 1: plain JAX mirroring the kernel's bf16-matmul/f32-acc ----
    bf16 = jnp.bfloat16
    xf = x.reshape(B, d_in).astype(jnp.float32)
    h_ref = jnp.maximum(
        jnp.dot(xf.astype(bf16), params["w1"].astype(bf16),
                preferred_element_type=jnp.float32) + params["b1"], 0.0)
    mu_ref = jnp.dot(h_ref.astype(bf16), params["w_mu"].astype(bf16),
                     preferred_element_type=jnp.float32) + params["b_mu"]
    lv_ref = jnp.dot(h_ref.astype(bf16), params["w_lv"].astype(bf16),
                     preferred_element_type=jnp.float32) + params["b_lv"]
    z_ref = mu_ref + eps * jnp.exp(0.5 * lv_ref)
    hd_ref = jnp.maximum(
        jnp.dot(z_ref.astype(bf16), params["wd1"].astype(bf16),
                preferred_element_type=jnp.float32) + params["bd1"], 0.0)
    xr_ref = (jnp.dot(hd_ref.astype(bf16), params["wd2"].astype(bf16),
                      preferred_element_type=jnp.float32)
              + params["bd2"]).reshape(B, C, H, W)

    assert jnp.allclose(mu, mu_ref, atol=2e-3), "mu mismatch"
    assert jnp.allclose(logvar, lv_ref, atol=2e-3), "logvar mismatch"
    assert jnp.allclose(z, z_ref, atol=2e-3), "z mismatch"
    assert jnp.allclose(x_recon, xr_ref, atol=2e-3), "x_recon mismatch"

    # ---- reference 2: full-f32 math (module semantics), loose tolerance ----
    h32 = jnp.maximum(xf @ params["w1"] + params["b1"], 0.0)
    mu32 = h32 @ params["w_mu"] + params["b_mu"]
    lv32 = h32 @ params["w_lv"] + params["b_lv"]
    z32 = mu32 + eps * jnp.exp(0.5 * lv32)
    hd32 = jnp.maximum(z32 @ params["wd1"] + params["bd1"], 0.0)
    xr32 = (hd32 @ params["wd2"] + params["bd2"]).reshape(B, C, H, W)
    assert jnp.allclose(mu, mu32, atol=2e-2, rtol=2e-2), "mu f32 drift"
    assert jnp.allclose(logvar, lv32, atol=2e-2, rtol=2e-2), "logvar f32 drift"
    assert jnp.allclose(z, z32, atol=2e-2, rtol=2e-2), "z f32 drift"
    assert jnp.allclose(x_recon, xr32, atol=2e-2, rtol=2e-2), "x_recon f32 drift"

    print("KERNEL_OK")
</pallas_src>

<mosaic_0001>
module attributes {stable_mosaic.version = 11 : i64} {
  func.func @_vade_forward_kernel(%arg0: i32, %arg1: memref<8x1024xbf16, #tpu.memory_space<vmem>>, %arg2: memref<8x128xf32, #tpu.memory_space<vmem>>, %arg3: memref<1024x32xbf16, #tpu.memory_space<vmem>>, %arg4: memref<1x32xf32, #tpu.memory_space<vmem>>, %arg5: memref<32x256xbf16, #tpu.memory_space<vmem>>, %arg6: memref<1x256xf32, #tpu.memory_space<vmem>>, %arg7: memref<128x32xbf16, #tpu.memory_space<vmem>>, %arg8: memref<1x32xf32, #tpu.memory_space<vmem>>, %arg9: memref<32x1024xbf16, #tpu.memory_space<vmem>>, %arg10: memref<1x1024xf32, #tpu.memory_space<vmem>>, %arg11: memref<8x1024xbf16, #tpu.memory_space<vmem>>, %arg12: memref<8x384xf32, #tpu.memory_space<vmem>>) attributes {dimension_semantics = [#tpu.dimension_semantics<parallel>], iteration_bounds = array<i64: 1>, scalar_prefetch = 0 : i64, scratch_operands = 0 : i64, tpu.core_type = #tpu.core_type<tc>, window_params = [{transform_indices = @transform_0, window_bounds = array<i64: 8, 1024>}, {transform_indices = @transform_1, window_bounds = array<i64: 8, 128>}, {pipeline_mode = #tpu.pipeline_mode<synchronous>, transform_indices = @transform_2, window_bounds = array<i64: 1024, 32>}, {pipeline_mode = #tpu.pipeline_mode<synchronous>, transform_indices = @transform_3, window_bounds = array<i64: 1, 32>}, {pipeline_mode = #tpu.pipeline_mode<synchronous>, transform_indices = @transform_4, window_bounds = array<i64: 32, 256>}, {pipeline_mode = #tpu.pipeline_mode<synchronous>, transform_indices = @transform_5, window_bounds = array<i64: 1, 256>}, {pipeline_mode = #tpu.pipeline_mode<synchronous>, transform_indices = @transform_6, window_bounds = array<i64: 128, 32>}, {pipeline_mode = #tpu.pipeline_mode<synchronous>, transform_indices = @transform_7, window_bounds = array<i64: 1, 32>}, {pipeline_mode = #tpu.pipeline_mode<synchronous>, transform_indices = @transform_8, window_bounds = array<i64: 32, 1024>}, {pipeline_mode = #tpu.pipeline_mode<synchronous>, transform_indices = @transform_9, window_bounds = array<i64: 1, 1024>}, {transform_indices = @transform_10, window_bounds = array<i64: 8, 1024>}, {transform_indices = @transform_11, window_bounds = array<i64: 8, 384>}]} {
    %c0 = arith.constant 0 : index
    %c0_0 = arith.constant 0 : index
    %0 = vector.load %arg1[%c0, %c0_0] : memref<8x1024xbf16, #tpu.memory_space<vmem>>, vector<8x1024xbf16>
    %c0_1 = arith.constant 0 : index
    %c0_2 = arith.constant 0 : index
    %1 = vector.load %arg2[%c0_1, %c0_2] : memref<8x128xf32, #tpu.memory_space<vmem>>, vector<8x128xf32>
    %c0_3 = arith.constant 0 : index
    %c0_4 = arith.constant 0 : index
    %2 = vector.load %arg3[%c0_3, %c0_4] : memref<1024x32xbf16, #tpu.memory_space<vmem>>, vector<1024x32xbf16>
    %cst = arith.constant dense<0.000000e+00> : vector<8x32xf32>
    %3 = tpu.matmul %0, %2, %cst {dimension_numbers = #tpu.dot_dimension_numbers<[1], [0], [0], [1], [0, 0, 1, 1], [], []>} : vector<8x1024xbf16>, vector<1024x32xbf16>, vector<8x32xf32> -> vector<8x32xf32>
    %c0_5 = arith.constant 0 : index
    %c0_6 = arith.constant 0 : index
    %4 = vector.load %arg4[%c0_5, %c0_6] : memref<1x32xf32, #tpu.memory_space<vmem>>, vector<1x32xf32>
    %5 = vector.broadcast %4 : vector<1x32xf32> to vector<8x32xf32>
    %6 = arith.addf %3, %5 : vector<8x32xf32>
    %cst_7 = arith.constant 0.000000e+00 : f32
    %7 = vector.broadcast %cst_7 : f32 to vector<8x32xf32>
    %8 = arith.maximumf %6, %7 : vector<8x32xf32>
    %9 = arith.truncf %8 : vector<8x32xf32> to vector<8x32xbf16>
    %c0_8 = arith.constant 0 : index
    %c0_9 = arith.constant 0 : index
    %10 = vector.load %arg5[%c0_8, %c0_9] : memref<32x256xbf16, #tpu.memory_space<vmem>>, vector<32x256xbf16>
    %cst_10 = arith.constant dense<0.000000e+00> : vector<8x256xf32>
    %11 = tpu.matmul %9, %10, %cst_10 {dimension_numbers = #tpu.dot_dimension_numbers<[1], [0], [0], [1], [0, 0, 1, 1], [], []>} : vector<8x32xbf16>, vector<32x256xbf16>, vector<8x256xf32> -> vector<8x256xf32>
    %c0_11 = arith.constant 0 : index
    %c0_12 = arith.constant 0 : index
    %12 = vector.load %arg6[%c0_11, %c0_12] : memref<1x256xf32, #tpu.memory_space<vmem>>, vector<1x256xf32>
    %13 = vector.broadcast %12 : vector<1x256xf32> to vector<8x256xf32>
    %14 = arith.addf %11, %13 : vector<8x256xf32>
    %15 = vector.extract_strided_slice %14 {offsets = [0, 0], sizes = [8, 128], strides = [1, 1]} : vector<8x256xf32> to vector<8x128xf32>
    %16 = vector.extract_strided_slice %14 {offsets = [0, 128], sizes = [8, 128], strides = [1, 1]} : vector<8x256xf32> to vector<8x128xf32>
    %cst_13 = arith.constant 5.000000e-01 : f32
    %17 = vector.broadcast %cst_13 : f32 to vector<8x128xf32>
    %18 = arith.mulf %17, %16 : vector<8x128xf32>
    %19 = math.exp %18 : vector<8x128xf32>
    %20 = arith.mulf %1, %19 : vector<8x128xf32>
    %21 = arith.addf %15, %20 : vector<8x128xf32>
    %22 = arith.truncf %21 : vector<8x128xf32> to vector<8x128xbf16>
    %c0_14 = arith.constant 0 : index
    %c0_15 = arith.constant 0 : index
    %23 = vector.load %arg7[%c0_14, %c0_15] : memref<128x32xbf16, #tpu.memory_space<vmem>>, vector<128x32xbf16>
    %cst_16 = arith.constant dense<0.000000e+00> : vector<8x32xf32>
    %24 = tpu.matmul %22, %23, %cst_16 {dimension_numbers = #tpu.dot_dimension_numbers<[1], [0], [0], [1], [0, 0, 1, 1], [], []>} : vector<8x128xbf16>, vector<128x32xbf16>, vector<8x32xf32> -> vector<8x32xf32>
    %c0_17 = arith.constant 0 : index
    %c0_18 = arith.constant 0 : index
    %25 = vector.load %arg8[%c0_17, %c0_18] : memref<1x32xf32, #tpu.memory_space<vmem>>, vector<1x32xf32>
    %26 = vector.broadcast %25 : vector<1x32xf32> to vector<8x32xf32>
    %27 = arith.addf %24, %26 : vector<8x32xf32>
    %cst_19 = arith.constant 0.000000e+00 : f32
    %28 = vector.broadcast %cst_19 : f32 to vector<8x32xf32>
    %29 = arith.maximumf %27, %28 : vector<8x32xf32>
    %30 = arith.truncf %29 : vector<8x32xf32> to vector<8x32xbf16>
    %c0_20 = arith.constant 0 : index
    %c0_21 = arith.constant 0 : index
    %31 = vector.load %arg9[%c0_20, %c0_21] : memref<32x1024xbf16, #tpu.memory_space<vmem>>, vector<32x1024xbf16>
    %cst_22 = arith.constant dense<0.000000e+00> : vector<8x1024xf32>
    %32 = tpu.matmul %30, %31, %cst_22 {dimension_numbers = #tpu.dot_dimension_numbers<[1], [0], [0], [1], [0, 0, 1, 1], [], []>} : vector<8x32xbf16>, vector<32x1024xbf16>, vector<8x1024xf32> -> vector<8x1024xf32>
    %c0_23 = arith.constant 0 : index
    %c0_24 = arith.constant 0 : index
    %33 = vector.load %arg10[%c0_23, %c0_24] : memref<1x1024xf32, #tpu.memory_space<vmem>>, vector<1x1024xf32>
    %34 = vector.broadcast %33 : vector<1x1024xf32> to vector<8x1024xf32>
    %35 = arith.addf %32, %34 : vector<8x1024xf32>
    %36 = arith.truncf %35 : vector<8x1024xf32> to vector<8x1024xbf16>
    %c0_25 = arith.constant 0 : index
    %c0_26 = arith.constant 0 : index
    %37 = vector.load %arg11[%c0_25, %c0_26] : memref<8x1024xbf16, #tpu.memory_space<vmem>>, vector<8x1024xbf16>
    tpu.vector_store %arg11[%c0_25, %c0_26], %36 {strides = array<i32>} : memref<8x1024xbf16, #tpu.memory_space<vmem>>, vector<8x1024xbf16>,
    %c0_27 = arith.constant 0 : index
    %c0_28 = arith.constant 0 : index
    %38 = vector.load %arg12[%c0_27, %c0_28] : memref<8x384xf32, #tpu.memory_space<vmem>>, vector<8x256xf32>
    tpu.vector_store %arg12[%c0_27, %c0_28], %14 {strides = array<i32>} : memref<8x384xf32, #tpu.memory_space<vmem>>, vector<8x256xf32>,
    %c0_29 = arith.constant 0 : index
    %c256 = arith.constant 256 : index
    %39 = vector.load %arg12[%c0_29, %c256] : memref<8x384xf32, #tpu.memory_space<vmem>>, vector<8x128xf32>
    tpu.vector_store %arg12[%c0_29, %c256], %21 {strides = array<i32>} : memref<8x384xf32, #tpu.memory_space<vmem>>, vector<8x128xf32>,
    return
  }
  func.func @transform_0(%arg0: i32) -> (i32, i32) {
    %c0_i32 = arith.constant 0 : i32
    %c0_i32_0 = arith.constant 0 : i32
    return %arg0, %c0_i32 : i32, i32
  }
  func.func @transform_1(%arg0: i32) -> (i32, i32) {
    %c0_i32 = arith.constant 0 : i32
    %c0_i32_0 = arith.constant 0 : i32
    return %arg0, %c0_i32 : i32, i32
  }
  func.func @transform_2(%arg0: i32) -> (i32, i32) {
    %c0_i32 = arith.constant 0 : i32
    %c0_i32_0 = arith.constant 0 : i32
    %c0_i32_1 = arith.constant 0 : i32
    return %c0_i32, %c0_i32_0 : i32, i32
  }
  func.func @transform_3(%arg0: i32) -> (i32, i32) {
    %c0_i32 = arith.constant 0 : i32
    %c0_i32_0 = arith.constant 0 : i32
    %c0_i32_1 = arith.constant 0 : i32
    return %c0_i32, %c0_i32_0 : i32, i32
  }
  func.func @transform_4(%arg0: i32) -> (i32, i32) {
    %c0_i32 = arith.constant 0 : i32
    %c0_i32_0 = arith.constant 0 : i32
    %c0_i32_1 = arith.constant 0 : i32
    return %c0_i32, %c0_i32_0 : i32, i32
  }
  func.func @transform_5(%arg0: i32) -> (i32, i32) {
    %c0_i32 = arith.constant 0 : i32
    %c0_i32_0 = arith.constant 0 : i32
    %c0_i32_1 = arith.constant 0 : i32
    return %c0_i32, %c0_i32_0 : i32, i32
  }
  func.func @transform_6(%arg0: i32) -> (i32, i32) {
    %c0_i32 = arith.constant 0 : i32
    %c0_i32_0 = arith.constant 0 : i32
    %c0_i32_1 = arith.constant 0 : i32
    return %c0_i32, %c0_i32_0 : i32, i32
  }
  func.func @transform_7(%arg0: i32) -> (i32, i32) {
    %c0_i32 = arith.constant 0 : i32
    %c0_i32_0 = arith.constant 0 : i32
    %c0_i32_1 = arith.constant 0 : i32
    return %c0_i32, %c0_i32_0 : i32, i32
  }
  func.func @transform_8(%arg0: i32) -> (i32, i32) {
    %c0_i32 = arith.constant 0 : i32
    %c0_i32_0 = arith.constant 0 : i32
    %c0_i32_1 = arith.constant 0 : i32
    return %c0_i32, %c0_i32_0 : i32, i32
  }
  func.func @transform_9(%arg0: i32) -> (i32, i32) {
    %c0_i32 = arith.constant 0 : i32
    %c0_i32_0 = arith.constant 0 : i32
    %c0_i32_1 = arith.constant 0 : i32
    return %c0_i32, %c0_i32_0 : i32, i32
  }
  func.func @transform_10(%arg0: i32) -> (i32, i32) {
    %c0_i32 = arith.constant 0 : i32
    %c0_i32_0 = arith.constant 0 : i32
    return %arg0, %c0_i32 : i32, i32
  }
  func.func @transform_11(%arg0: i32) -> (i32, i32) {
    %c0_i32 = arith.constant 0 : i32
    %c0_i32_0 = arith.constant 0 : i32
    return %arg0, %c0_i32 : i32, i32
  }
}

</mosaic_0001>

<llo_original>
// kernel: tpu_custom_call.1
$region0: #{tpu_custom_call.1}
  #allocation0 [shape = 'u32[]', space=smem, size = 0x4, offset = 0x4, fixed_abs, tag = 'smem constant byte address 0x4 - core index']
  #allocation1 [shape = 'u32[144,128]{1,0:T(1,128)}', space=vmem, size = 0x12000, scoped, tag = 'internal scratch']
  %s0 = inlined_call_operand.vmem [shape: bf16[8,1024], index: 0, kind: input, shape index: {}]
  %s1 = inlined_call_operand.vmem [shape: f32[8,128], index: 1, kind: input, shape index: {}]
  %s2 = inlined_call_operand.vmem [shape: bf16[1024,32], index: 2, kind: input, shape index: {}]
  %s3 = inlined_call_operand.vmem [shape: f32[1,32], index: 3, kind: input, shape index: {}]
  %s4 = inlined_call_operand.vmem [shape: bf16[32,256], index: 4, kind: input, shape index: {}]
  %s5 = inlined_call_operand.vmem [shape: f32[1,256], index: 5, kind: input, shape index: {}]
  %s6 = inlined_call_operand.vmem [shape: bf16[128,32], index: 6, kind: input, shape index: {}]
  %s7 = inlined_call_operand.vmem [shape: f32[1,32], index: 7, kind: input, shape index: {}]
  %s8 = inlined_call_operand.vmem [shape: bf16[32,1024], index: 8, kind: input, shape index: {}]
  %s9 = inlined_call_operand.vmem [shape: f32[1,1024], index: 9, kind: input, shape index: {}]
  %s10 = inlined_call_operand.hbm [shape: bf16[8,1024], index: 10, kind: output, shape index: {0}]
  %s11 = inlined_call_operand.hbm [shape: f32[8,384], index: 11, kind: output, shape index: {1}]
  %12 = xla_tuple %s10, %s11
  %s13 = sld [smem:[#allocation0]]
  $region58: #{tpu_custom_call.1} parent=0
    _
  %s15 = ssub.s32 1, %s13
  %s16 = scalar_select 0, %s15, %s13
  $region1: #{tpu_custom_call.1} parent=0
    #allocation2 [shape = 'u8[16384]{0}', space=vmem, size = 0x4000, scoped, tag = 'output window, operand 0, single buffered']
    #allocation3 [shape = 's32[1]{0}', space=sflag, size = 0x4, scoped, tag = 'scoped memory for tpu_custom_call.1']
    #allocation4 [shape = 'u8[12288]{0}', space=vmem, size = 0x3000, scoped, tag = 'output window, operand 1, single buffered']
    #allocation5 [shape = 's32[1]{0}', space=sflag, size = 0x4, scoped, tag = 'scoped memory for tpu_custom_call.1']
    %17 = vsyncpa [#allocation3], 0
    %18 = vsyncpa [#allocation5], 0
    // Predicated region
    $region2: #{tpu_custom_call.1} parent=1 // pred_check
      _
    $region3: #{tpu_custom_call.1} parent=1 // pred_check_branch
      %20 = sbr.rel (0) target = $region5
    $region4: #{tpu_custom_call.1} parent=1 // pred_region
      _
    $region5: #{tpu_custom_call.1} parent=1 // pred_fallthru
      _
    // Predicated region
    $region6: #{tpu_custom_call.1} parent=1 // pred_check
      _
    $region7: #{tpu_custom_call.1} parent=1 // pred_check_branch
      %22 = sbr.rel (0) target = $region9
    $region8: #{tpu_custom_call.1} parent=1 // pred_region
      _
    $region9: #{tpu_custom_call.1} parent=1 // pred_fallthru
      _
    // Predicated region
    $region10: #{tpu_custom_call.1} parent=1 // pred_check
      _
    $region11: #{tpu_custom_call.1} parent=1 // pred_check_branch
      %24 = sbr.rel (0) target = $region13
    $region12: #{tpu_custom_call.1} parent=1 // pred_region
      _
    $region13: #{tpu_custom_call.1} parent=1 // pred_fallthru
      _
    // Predicated region
    $region14: #{tpu_custom_call.1} parent=1 // pred_check
      _
    $region15: #{tpu_custom_call.1} parent=1 // pred_check_branch
      %26 = sbr.rel (0) target = $region17
    $region16: #{tpu_custom_call.1} parent=1 // pred_region
      _
    $region17: #{tpu_custom_call.1} parent=1 // pred_fallthru
      _
    // Predicated region
    $region18: #{tpu_custom_call.1} parent=1 // pred_check
      _
    $region19: #{tpu_custom_call.1} parent=1 // pred_check_branch
      %28 = sbr.rel (0) target = $region21
    $region20: #{tpu_custom_call.1} parent=1 // pred_region
      _
    $region21: #{tpu_custom_call.1} parent=1 // pred_fallthru
      _
    // Predicated region
    $region22: #{tpu_custom_call.1} parent=1 // pred_check
      _
    $region23: #{tpu_custom_call.1} parent=1 // pred_check_branch
      %30 = sbr.rel (0) target = $region25
    $region24: #{tpu_custom_call.1} parent=1 // pred_region
      _
    $region25: #{tpu_custom_call.1} parent=1 // pred_fallthru
      _
    // Predicated region
    $region26: #{tpu_custom_call.1} parent=1 // pred_check
      _
    $region27: #{tpu_custom_call.1} parent=1 // pred_check_branch
      %32 = sbr.rel (0) target = $region29
    $region28: #{tpu_custom_call.1} parent=1 // pred_region
      _
    $region29: #{tpu_custom_call.1} parent=1 // pred_fallthru
      _
    // Predicated region
    $region30: #{tpu_custom_call.1} parent=1 // pred_check
      _
    $region31: #{tpu_custom_call.1} parent=1 // pred_check_branch
      %34 = sbr.rel (0) target = $region33
    $region32: #{tpu_custom_call.1} parent=1 // pred_region
      _
    $region33: #{tpu_custom_call.1} parent=1 // pred_fallthru
      _
    // Predicated region
    $region34: #{tpu_custom_call.1} parent=1 // pred_check
      _
    $region35: #{tpu_custom_call.1} parent=1 // pred_check_branch
      %36 = sbr.rel (0) target = $region37
    $region36: #{tpu_custom_call.1} parent=1 // pred_region
      _
    $region37: #{tpu_custom_call.1} parent=1 // pred_fallthru
      _
    // Predicated region
    $region38: #{tpu_custom_call.1} parent=1 // pred_check
      _
    $region39: #{tpu_custom_call.1} parent=1 // pred_check_branch
      %38 = sbr.rel (0) target = $region41
    $region40: #{tpu_custom_call.1} parent=1 // pred_region
      _
    $region41: #{tpu_custom_call.1} parent=1 // pred_fallthru
      _
    %v40 = vld [vmem:[%s0] sm:$0xff]
    %v41 = vld [vmem:[%s0 + $0x8] sm:$0xff]
    %v42 = vld [vmem:[%s0 + $0x10] sm:$0xff]
    %v43 = vld [vmem:[%s0 + $0x18] sm:$0xff]
    %v44 = vld [vmem:[%s1] sm:$0xff]
    %v45 = vld [vmem:[%s2] sm:$0xf]
    %v46 = vld [vmem:[%s2 + $0x4] sm:$0xf]
    %v47 = vld [vmem:[%s2 + $0x8] sm:$0xf]
    %v48 = vld [vmem:[%s2 + $0xc] sm:$0xf]
    %v49 = vld [vmem:[%s2 + $0x10] sm:$0xf]
    %v50 = vld [vmem:[%s2 + $0x14] sm:$0xf]
    %v51 = vld [vmem:[%s2 + $0x18] sm:$0xf]
    %v52 = vld [vmem:[%s2 + $0x1c] sm:$0xf]
    %v53 = vld [vmem:[%s2 + $0x20] sm:$0xf]
    %v54 = vld [vmem:[%s2 + $0x24] sm:$0xf]
    %v55 = vld [vmem:[%s2 + $0x28] sm:$0xf]
    %v56 = vld [vmem:[%s2 + $0x2c] sm:$0xf]
    %v57 = vld [vmem:[%s2 + $0x30] sm:$0xf]
    %v58 = vld [vmem:[%s2 + $0x34] sm:$0xf]
    %v59 = vld [vmem:[%s2 + $0x38] sm:$0xf]
    %v60 = vld [vmem:[%s2 + $0x3c] sm:$0xf]
    %v61 = vld [vmem:[%s2 + $0x40] sm:$0xf]
    %v62 = vld [vmem:[%s2 + $0x44] sm:$0xf]
    %v63 = vld [vmem:[%s2 + $0x48] sm:$0xf]
    %v64 = vld [vmem:[%s2 + $0x4c] sm:$0xf]
    %v65 = vld [vmem:[%s2 + $0x50] sm:$0xf]
    %v66 = vld [vmem:[%s2 + $0x54] sm:$0xf]
    %v67 = vld [vmem:[%s2 + $0x58] sm:$0xf]
    %v68 = vld [vmem:[%s2 + $0x5c] sm:$0xf]
    %v69 = vld [vmem:[%s2 + $0x60] sm:$0xf]
    %v70 = vld [vmem:[%s2 + $0x64] sm:$0xf]
    %v71 = vld [vmem:[%s2 + $0x68] sm:$0xf]
    %v72 = vld [vmem:[%s2 + $0x6c] sm:$0xf]
    %v73 = vld [vmem:[%s2 + $0x70] sm:$0xf]
    %v74 = vld [vmem:[%s2 + $0x74] sm:$0xf]
    %v75 = vld [vmem:[%s2 + $0x78] sm:$0xf]
    %v76 = vld [vmem:[%s2 + $0x7c] sm:$0xf]
    %v77 = vld [vmem:[%s2 + $0x80] sm:$0xf]
    %v78 = vld [vmem:[%s2 + $0x84] sm:$0xf]
    %v79 = vld [vmem:[%s2 + $0x88] sm:$0xf]
    %v80 = vld [vmem:[%s2 + $0x8c] sm:$0xf]
    %v81 = vld [vmem:[%s2 + $0x90] sm:$0xf]
    %v82 = vld [vmem:[%s2 + $0x94] sm:$0xf]
    %v83 = vld [vmem:[%s2 + $0x98] sm:$0xf]
    %v84 = vld [vmem:[%s2 + $0x9c] sm:$0xf]
    %v85 = vld [vmem:[%s2 + $0xa0] sm:$0xf]
    %v86 = vld [vmem:[%s2 + $0xa4] sm:$0xf]
    %v87 = vld [vmem:[%s2 + $0xa8] sm:$0xf]
    %v88 = vld [vmem:[%s2 + $0xac] sm:$0xf]
    %v89 = vld [vmem:[%s2 + $0xb0] sm:$0xf]
    %v90 = vld [vmem:[%s2 + $0xb4] sm:$0xf]
    %v91 = vld [vmem:[%s2 + $0xb8] sm:$0xf]
    %v92 = vld [vmem:[%s2 + $0xbc] sm:$0xf]
    %v93 = vld [vmem:[%s2 + $0xc0] sm:$0xf]
    %v94 = vld [vmem:[%s2 + $0xc4] sm:$0xf]
    %v95 = vld [vmem:[%s2 + $0xc8] sm:$0xf]
    %v96 = vld [vmem:[%s2 + $0xcc] sm:$0xf]
    %v97 = vld [vmem:[%s2 + $0xd0] sm:$0xf]
    %v98 = vld [vmem:[%s2 + $0xd4] sm:$0xf]
    %v99 = vld [vmem:[%s2 + $0xd8] sm:$0xf]
    %v100 = vld [vmem:[%s2 + $0xdc] sm:$0xf]
    %v101 = vld [vmem:[%s2 + $0xe0] sm:$0xf]
    %v102 = vld [vmem:[%s2 + $0xe4] sm:$0xf]
    %v103 = vld [vmem:[%s2 + $0xe8] sm:$0xf]
    %v104 = vld [vmem:[%s2 + $0xec] sm:$0xf]
    %v105 = vld [vmem:[%s2 + $0xf0] sm:$0xf]
    %v106 = vld [vmem:[%s2 + $0xf4] sm:$0xf]
    %v107 = vld [vmem:[%s2 + $0xf8] sm:$0xf]
    %v108 = vld [vmem:[%s2 + $0xfc] sm:$0xf]
    %v109 = vld [vmem:[%s2 + $0x100] sm:$0xf]
    %v110 = vld [vmem:[%s2 + $0x104] sm:$0xf]
    %v111 = vld [vmem:[%s2 + $0x108] sm:$0xf]
    %v112 = vld [vmem:[%s2 + $0x10c] sm:$0xf]
    %v113 = vld [vmem:[%s2 + $0x110] sm:$0xf]
    %v114 = vld [vmem:[%s2 + $0x114] sm:$0xf]
    %v115 = vld [vmem:[%s2 + $0x118] sm:$0xf]
    %v116 = vld [vmem:[%s2 + $0x11c] sm:$0xf]
    %v117 = vld [vmem:[%s2 + $0x120] sm:$0xf]
    %v118 = vld [vmem:[%s2 + $0x124] sm:$0xf]
    %v119 = vld [vmem:[%s2 + $0x128] sm:$0xf]
    %v120 = vld [vmem:[%s2 + $0x12c] sm:$0xf]
    %v121 = vld [vmem:[%s2 + $0x130] sm:$0xf]
    %v122 = vld [vmem:[%s2 + $0x134] sm:$0xf]
    %v123 = vld [vmem:[%s2 + $0x138] sm:$0xf]
    %v124 = vld [vmem:[%s2 + $0x13c] sm:$0xf]
    %v125 = vld [vmem:[%s2 + $0x140] sm:$0xf]
    %v126 = vld [vmem:[%s2 + $0x144] sm:$0xf]
    %v127 = vld [vmem:[%s2 + $0x148] sm:$0xf]
    %v128 = vld [vmem:[%s2 + $0x14c] sm:$0xf]
    %v129 = vld [vmem:[%s2 + $0x150] sm:$0xf]
    %v130 = vld [vmem:[%s2 + $0x154] sm:$0xf]
    %v131 = vld [vmem:[%s2 + $0x158] sm:$0xf]
    %v132 = vld [vmem:[%s2 + $0x15c] sm:$0xf]
    %v133 = vld [vmem:[%s2 + $0x160] sm:$0xf]
    %v134 = vld [vmem:[%s2 + $0x164] sm:$0xf]
    %v135 = vld [vmem:[%s2 + $0x168] sm:$0xf]
    %v136 = vld [vmem:[%s2 + $0x16c] sm:$0xf]
    %v137 = vld [vmem:[%s2 + $0x170] sm:$0xf]
    %v138 = vld [vmem:[%s2 + $0x174] sm:$0xf]
    %v139 = vld [vmem:[%s2 + $0x178] sm:$0xf]
    %v140 = vld [vmem:[%s2 + $0x17c] sm:$0xf]
    %v141 = vld [vmem:[%s2 + $0x180] sm:$0xf]
    %v142 = vld [vmem:[%s2 + $0x184] sm:$0xf]
    %v143 = vld [vmem:[%s2 + $0x188] sm:$0xf]
    %v144 = vld [vmem:[%s2 + $0x18c] sm:$0xf]
    %v145 = vld [vmem:[%s2 + $0x190] sm:$0xf]
    %v146 = vld [vmem:[%s2 + $0x194] sm:$0xf]
    %v147 = vld [vmem:[%s2 + $0x198] sm:$0xf]
    %v148 = vld [vmem:[%s2 + $0x19c] sm:$0xf]
    %v149 = vld [vmem:[%s2 + $0x1a0] sm:$0xf]
    %v150 = vld [vmem:[%s2 + $0x1a4] sm:$0xf]
    %v151 = vld [vmem:[%s2 + $0x1a8] sm:$0xf]
    %v152 = vld [vmem:[%s2 + $0x1ac] sm:$0xf]
    %v153 = vld [vmem:[%s2 + $0x1b0] sm:$0xf]
    %v154 = vld [vmem:[%s2 + $0x1b4] sm:$0xf]
    %v155 = vld [vmem:[%s2 + $0x1b8] sm:$0xf]
    %v156 = vld [vmem:[%s2 + $0x1bc] sm:$0xf]
    %v157 = vld [vmem:[%s2 + $0x1c0] sm:$0xf]
    %v158 = vld [vmem:[%s2 + $0x1c4] sm:$0xf]
    %v159 = vld [vmem:[%s2 + $0x1c8] sm:$0xf]
    %v160 = vld [vmem:[%s2 + $0x1cc] sm:$0xf]
    %v161 = vld [vmem:[%s2 + $0x1d0] sm:$0xf]
    %v162 = vld [vmem:[%s2 + $0x1d4] sm:$0xf]
    %v163 = vld [vmem:[%s2 + $0x1d8] sm:$0xf]
    %v164 = vld [vmem:[%s2 + $0x1dc] sm:$0xf]
    %v165 = vld [vmem:[%s2 + $0x1e0] sm:$0xf]
    %v166 = vld [vmem:[%s2 + $0x1e4] sm:$0xf]
    %v167 = vld [vmem:[%s2 + $0x1e8] sm:$0xf]
    %v168 = vld [vmem:[%s2 + $0x1ec] sm:$0xf]
    %v169 = vld [vmem:[%s2 + $0x1f0] sm:$0xf]
    %v170 = vld [vmem:[%s2 + $0x1f4] sm:$0xf]
    %v171 = vld [vmem:[%s2 + $0x1f8] sm:$0xf]
    %v172 = vld [vmem:[%s2 + $0x1fc] sm:$0xf]
    %v173 = vld [vmem:[%s3] sm:$0x1]
    %v175 = vlaneseq
    %v176 = vshrl.u32 %v175, 7
    %v177 = vsub.s32 0, %v176
    %v178 = vrot.slane %v173, %v177
    %v184 = vunpack.c.l.b16 %v40
    %v185 = vunpack.c.h.b16 %v40
    %v186 = vunpack.c.l.b16 %v41
    %v187 = vunpack.c.h.b16 %v41
    %v188 = vunpack.c.l.b16 %v42
    %v189 = vunpack.c.h.b16 %v42
    %v190 = vunpack.c.l.b16 %v43
    %v191 = vunpack.c.h.b16 %v43
    %v192 = vpack.c.b16 %v184, %v184
    %v193 = vpack.c.b16 %v185, %v185
    %v194 = vpack.c.b16 %v186, %v186
    %v195 = vpack.c.b16 %v187, %v187
    %v196 = vpack.c.b16 %v188, %v188
    %v197 = vpack.c.b16 %v189, %v189
    %v198 = vpack.c.b16 %v190, %v190
    %v199 = vpack.c.b16 %v191, %v191
    %v336 = vunpack.c.l.b16 %v45
    %v337 = vunpack.c.l.b16 %v46
    %v338 = vunpack.c.l.b16 %v47
    %v339 = vunpack.c.l.b16 %v48
    %v340 = vunpack.c.l.b16 %v49
    %v341 = vunpack.c.l.b16 %v50
    %v342 = vunpack.c.l.b16 %v51
    %v343 = vunpack.c.l.b16 %v52
    %v344 = vunpack.c.l.b16 %v53
    %v345 = vunpack.c.l.b16 %v54
    %v346 = vunpack.c.l.b16 %v55
    %v347 = vunpack.c.l.b16 %v56
    %v348 = vunpack.c.l.b16 %v57
    %v349 = vunpack.c.l.b16 %v58
    %v350 = vunpack.c.l.b16 %v59
    %v351 = vunpack.c.l.b16 %v60
    %v352 = vunpack.c.l.b16 %v61
    %v353 = vunpack.c.l.b16 %v62
    %v354 = vunpack.c.l.b16 %v63
    %v355 = vunpack.c.l.b16 %v64
    %v356 = vunpack.c.l.b16 %v65
    %v357 = vunpack.c.l.b16 %v66
    %v358 = vunpack.c.l.b16 %v67
    %v359 = vunpack.c.l.b16 %v68
    %v360 = vunpack.c.l.b16 %v69
    %v361 = vunpack.c.l.b16 %v70
    %v362 = vunpack.c.l.b16 %v71
    %v363 = vunpack.c.l.b16 %v72
    %v364 = vunpack.c.l.b16 %v73
    %v365 = vunpack.c.l.b16 %v74
    %v366 = vunpack.c.l.b16 %v75
    %v367 = vunpack.c.l.b16 %v76
    %v368 = vunpack.c.l.b16 %v77
    %v369 = vunpack.c.l.b16 %v78
    %v370 = vunpack.c.l.b16 %v79
    %v371 = vunpack.c.l.b16 %v80
    %v372 = vunpack.c.l.b16 %v81
    %v373 = vunpack.c.l.b16 %v82
    %v374 = vunpack.c.l.b16 %v83
    %v375 = vunpack.c.l.b16 %v84
    %v376 = vunpack.c.l.b16 %v85
    %v377 = vunpack.c.l.b16 %v86
    %v378 = vunpack.c.l.b16 %v87
    %v379 = vunpack.c.l.b16 %v88
    %v380 = vunpack.c.l.b16 %v89
    %v381 = vunpack.c.l.b16 %v90
    %v382 = vunpack.c.l.b16 %v91
    %v383 = vunpack.c.l.b16 %v92
    %v384 = vunpack.c.l.b16 %v93
    %v385 = vunpack.c.l.b16 %v94
    %v386 = vunpack.c.l.b16 %v95
    %v387 = vunpack.c.l.b16 %v96
    %v388 = vunpack.c.l.b16 %v97
    %v389 = vunpack.c.l.b16 %v98
    %v390 = vunpack.c.l.b16 %v99
    %v391 = vunpack.c.l.b16 %v100
    %v392 = vunpack.c.l.b16 %v101
    %v393 = vunpack.c.l.b16 %v102
    %v394 = vunpack.c.l.b16 %v103
    %v395 = vunpack.c.l.b16 %v104
    %v396 = vunpack.c.l.b16 %v105
    %v397 = vunpack.c.l.b16 %v106
    %v398 = vunpack.c.l.b16 %v107
    %v399 = vunpack.c.l.b16 %v108
    %v400 = vunpack.c.l.b16 %v109
    %v401 = vunpack.c.l.b16 %v110
    %v402 = vunpack.c.l.b16 %v111
    %v403 = vunpack.c.l.b16 %v112
    %v404 = vunpack.c.l.b16 %v113
    %v405 = vunpack.c.l.b16 %v114
    %v406 = vunpack.c.l.b16 %v115
    %v407 = vunpack.c.l.b16 %v116
    %v408 = vunpack.c.l.b16 %v117
    %v409 = vunpack.c.l.b16 %v118
    %v410 = vunpack.c.l.b16 %v119
    %v411 = vunpack.c.l.b16 %v120
    %v412 = vunpack.c.l.b16 %v121
    %v413 = vunpack.c.l.b16 %v122
    %v414 = vunpack.c.l.b16 %v123
    %v415 = vunpack.c.l.b16 %v124
    %v416 = vunpack.c.l.b16 %v125
    %v417 = vunpack.c.l.b16 %v126
    %v418 = vunpack.c.l.b16 %v127
    %v419 = vunpack.c.l.b16 %v128
    %v420 = vunpack.c.l.b16 %v129
    %v421 = vunpack.c.l.b16 %v130
    %v422 = vunpack.c.l.b16 %v131
    %v423 = vunpack.c.l.b16 %v132
    %v424 = vunpack.c.l.b16 %v133
    %v425 = vunpack.c.l.b16 %v134
    %v426 = vunpack.c.l.b16 %v135
    %v427 = vunpack.c.l.b16 %v136
    %v428 = vunpack.c.l.b16 %v137
    %v429 = vunpack.c.l.b16 %v138
    %v430 = vunpack.c.l.b16 %v139
    %v431 = vunpack.c.l.b16 %v140
    %v432 = vunpack.c.l.b16 %v141
    %v433 = vunpack.c.l.b16 %v142
    %v434 = vunpack.c.l.b16 %v143
    %v435 = vunpack.c.l.b16 %v144
    %v436 = vunpack.c.l.b16 %v145
    %v437 = vunpack.c.l.b16 %v146
    %v438 = vunpack.c.l.b16 %v147
    %v439 = vunpack.c.l.b16 %v148
    %v440 = vunpack.c.l.b16 %v149
    %v441 = vunpack.c.l.b16 %v150
    %v442 = vunpack.c.l.b16 %v151
    %v443 = vunpack.c.l.b16 %v152
    %v444 = vunpack.c.l.b16 %v153
    %v445 = vunpack.c.l.b16 %v154
    %v446 = vunpack.c.l.b16 %v155
    %v447 = vunpack.c.l.b16 %v156
    %v448 = vunpack.c.l.b16 %v157
    %v449 = vunpack.c.l.b16 %v158
    %v450 = vunpack.c.l.b16 %v159
    %v451 = vunpack.c.l.b16 %v160
    %v452 = vunpack.c.l.b16 %v161
    %v453 = vunpack.c.l.b16 %v162
    %v454 = vunpack.c.l.b16 %v163
    %v455 = vunpack.c.l.b16 %v164
    %v456 = vunpack.c.l.b16 %v165
    %v457 = vunpack.c.l.b16 %v166
    %v458 = vunpack.c.l.b16 %v167
    %v459 = vunpack.c.l.b16 %v168
    %v460 = vunpack.c.l.b16 %v169
    %v461 = vunpack.c.l.b16 %v170
    %v462 = vunpack.c.l.b16 %v171
    %v463 = vunpack.c.l.b16 %v172
    %v464 = vpack.c.b16 %v337, %v336
    %v465 = vpack.c.b16 %v339, %v338
    %v466 = vpack.c.b16 %v341, %v340
    %v467 = vpack.c.b16 %v343, %v342
    %v468 = vpack.c.b16 %v345, %v344
    %v469 = vpack.c.b16 %v347, %v346
    %v470 = vpack.c.b16 %v349, %v348
    %v471 = vpack.c.b16 %v351, %v350
    %v472 = vpack.c.b16 %v353, %v352
    %v473 = vpack.c.b16 %v355, %v354
    %v474 = vpack.c.b16 %v357, %v356
    %v475 = vpack.c.b16 %v359, %v358
    %v476 = vpack.c.b16 %v361, %v360
    %v477 = vpack.c.b16 %v363, %v362
    %v478 = vpack.c.b16 %v365, %v364
    %v479 = vpack.c.b16 %v367, %v366
    %v480 = vpack.c.b16 %v369, %v368
    %v481 = vpack.c.b16 %v371, %v370
    %v482 = vpack.c.b16 %v373, %v372
    %v483 = vpack.c.b16 %v375, %v374
    %v484 = vpack.c.b16 %v377, %v376
    %v485 = vpack.c.b16 %v379, %v378
    %v486 = vpack.c.b16 %v381, %v380
    %v487 = vpack.c.b16 %v383, %v382
    %v488 = vpack.c.b16 %v385, %v384
    %v489 = vpack.c.b16 %v387, %v386
    %v490 = vpack.c.b16 %v389, %v388
    %v491 = vpack.c.b16 %v391, %v390
    %v492 = vpack.c.b16 %v393, %v392
    %v493 = vpack.c.b16 %v395, %v394
    %v494 = vpack.c.b16 %v397, %v396
    %v495 = vpack.c.b16 %v399, %v398
    %v496 = vpack.c.b16 %v401, %v400
    %v497 = vpack.c.b16 %v403, %v402
    %v498 = vpack.c.b16 %v405, %v404
    %v499 = vpack.c.b16 %v407, %v406
    %v500 = vpack.c.b16 %v409, %v408
    %v501 = vpack.c.b16 %v411, %v410
    %v502 = vpack.c.b16 %v413, %v412
    %v503 = vpack.c.b16 %v415, %v414
    %v504 = vpack.c.b16 %v417, %v416
    %v505 = vpack.c.b16 %v419, %v418
    %v506 = vpack.c.b16 %v421, %v420
    %v507 = vpack.c.b16 %v423, %v422
    %v508 = vpack.c.b16 %v425, %v424
    %v509 = vpack.c.b16 %v427, %v426
    %v510 = vpack.c.b16 %v429, %v428
    %v511 = vpack.c.b16 %v431, %v430
    %v512 = vpack.c.b16 %v433, %v432
    %v513 = vpack.c.b16 %v435, %v434
    %v514 = vpack.c.b16 %v437, %v436
    %v515 = vpack.c.b16 %v439, %v438
    %v516 = vpack.c.b16 %v441, %v440
    %v517 = vpack.c.b16 %v443, %v442
    %v518 = vpack.c.b16 %v445, %v444
    %v519 = vpack.c.b16 %v447, %v446
    %v520 = vpack.c.b16 %v449, %v448
    %v521 = vpack.c.b16 %v451, %v450
    %v522 = vpack.c.b16 %v453, %v452
    %v523 = vpack.c.b16 %v455, %v454
    %v524 = vpack.c.b16 %v457, %v456
    %v525 = vpack.c.b16 %v459, %v458
    %v526 = vpack.c.b16 %v461, %v460
    %v527 = vpack.c.b16 %v463, %v462
    %592 = vmatprep.subr.bf16.mxu0 0
    %593 = vmatpush1.bf16.msra.mxu0 %v464
    %594 = vmatprep.subr.bf16.mxu0 0
    %595 = vmatpush1.bf16.msra.mxu0 %v465
    %596 = vmatprep.subr.bf16.mxu0 0
    %597 = vmatpush1.bf16.msra.mxu0 %v466
    %598 = vmatprep.subr.bf16.mxu0 0
    %599 = vmatpush1.bf16.msra.mxu0 %v467
    %600 = vmatprep.subr.bf16.mxu0 0
    %601 = vmatpush1.bf16.msra.mxu0 %v468
    %602 = vmatprep.subr.bf16.mxu0 0
    %603 = vmatpush1.bf16.msra.mxu0 %v469
    %604 = vmatprep.subr.bf16.mxu0 0
    %605 = vmatpush1.bf16.msra.mxu0 %v470
    %606 = vmatprep.subr.bf16.mxu0 0
    %607 = vmatpush1.bf16.msra.mxu0 %v471
    %608 = vmatprep.subr.bf16.mxu0 0
    %609 = vmatpush1.bf16.msra.mxu0 %v472
    %610 = vmatprep.subr.bf16.mxu0 0
    %611 = vmatpush1.bf16.msra.mxu0 %v473
    %612 = vmatprep.subr.bf16.mxu0 0
    %613 = vmatpush1.bf16.msra.mxu0 %v474
    %614 = vmatprep.subr.bf16.mxu0 0
    %615 = vmatpush1.bf16.msra.mxu0 %v475
    %616 = vmatprep.subr.bf16.mxu0 0
    %617 = vmatpush1.bf16.msra.mxu0 %v476
    %618 = vmatprep.subr.bf16.mxu0 0
    %619 = vmatpush1.bf16.msra.mxu0 %v477
    %620 = vmatprep.subr.bf16.mxu0 0
    %621 = vmatpush1.bf16.msra.mxu0 %v478
    %622 = vmatprep.subr.bf16.mxu0 0
    %623 = vmatpush1.bf16.msra.mxu0 %v479
    %624 = vmatprep.mubr.bf16.mxu0 %v193
    %625 = vmatmul.mubr.bf16.gmra.mrb[0].mxu0 %v192
    %v626 = vpop.f32.mrb[0].mxu0
    %v627 = vadd.f32 %v178, %v626
    %v628 = vpop.f32.mrb[0].mxu0
    %v629 = vpop.f32.mrb[0].mxu0
    %v630 = vpop.f32.mrb[0].mxu0
    %631 = vdwg.mxu0
    %632 = vmatprep.subr.bf16.mxu0 0
    %633 = vmatpush1.bf16.msra.mxu0 %v480
    %634 = vmatprep.subr.bf16.mxu0 0
    %635 = vmatpush1.bf16.msra.mxu0 %v481
    %636 = vmatprep.subr.bf16.mxu0 0
    %637 = vmatpush1.bf16.msra.mxu0 %v482
    %638 = vmatprep.subr.bf16.mxu0 0
    %639 = vmatpush1.bf16.msra.mxu0 %v483
    %640 = vmatprep.subr.bf16.mxu0 0
    %641 = vmatpush1.bf16.msra.mxu0 %v484
    %642 = vmatprep.subr.bf16.mxu0 0
    %643 = vmatpush1.bf16.msra.mxu0 %v485
    %644 = vmatprep.subr.bf16.mxu0 0
    %645 = vmatpush1.bf16.msra.mxu0 %v486
    %646 = vmatprep.subr.bf16.mxu0 0
    %647 = vmatpush1.bf16.msra.mxu0 %v487
    %648 = vmatprep.subr.bf16.mxu0 0
    %649 = vmatpush1.bf16.msra.mxu0 %v488
    %650 = vmatprep.subr.bf16.mxu0 0
    %651 = vmatpush1.bf16.msra.mxu0 %v489
    %652 = vmatprep.subr.bf16.mxu0 0
    %653 = vmatpush1.bf16.msra.mxu0 %v490
    %654 = vmatprep.subr.bf16.mxu0 0
    %655 = vmatpush1.bf16.msra.mxu0 %v491
    %656 = vmatprep.subr.bf16.mxu0 0
    %657 = vmatpush1.bf16.msra.mxu0 %v492
    %658 = vmatprep.subr.bf16.mxu0 0
    %659 = vmatpush1.bf16.msra.mxu0 %v493
    %660 = vmatprep.subr.bf16.mxu0 0
    %661 = vmatpush1.bf16.msra.mxu0 %v494
    %662 = vmatprep.subr.bf16.mxu0 0
    %663 = vmatpush1.bf16.msra.mxu0 %v495
    %664 = vmatprep.mubr.bf16.mxu0 %v195
    %665 = vmatmul.mubr.bf16.gmra.mrb[0].mxu0 %v194
    %v666 = vpop.f32.mrb[0].mxu0
    %v667 = vadd.f32 %v627, %v666
    %v668 = vpop.f32.mrb[0].mxu0
    %v669 = vpop.f32.mrb[0].mxu0
    %v670 = vpop.f32.mrb[0].mxu0
    %671 = vdwg.mxu0
    %672 = vmatprep.subr.bf16.mxu0 0
    %673 = vmatpush1.bf16.msra.mxu0 %v496
    %674 = vmatprep.subr.bf16.mxu0 0
    %675 = vmatpush1.bf16.msra.mxu0 %v497
    %676 = vmatprep.subr.bf16.mxu0 0
    %677 = vmatpush1.bf16.msra.mxu0 %v498
    %678 = vmatprep.subr.bf16.mxu0 0
    %679 = vmatpush1.bf16.msra.mxu0 %v499
    %680 = vmatprep.subr.bf16.mxu0 0
    %681 = vmatpush1.bf16.msra.mxu0 %v500
    %682 = vmatprep.subr.bf16.mxu0 0
    %683 = vmatpush1.bf16.msra.mxu0 %v501
    %684 = vmatprep.subr.bf16.mxu0 0
    %685 = vmatpush1.bf16.msra.mxu0 %v502
    %686 = vmatprep.subr.bf16.mxu0 0
    %687 = vmatpush1.bf16.msra.mxu0 %v503
    %688 = vmatprep.subr.bf16.mxu0 0
    %689 = vmatpush1.bf16.msra.mxu0 %v504
    %690 = vmatprep.subr.bf16.mxu0 0
    %691 = vmatpush1.bf16.msra.mxu0 %v505
    %692 = vmatprep.subr.bf16.mxu0 0
    %693 = vmatpush1.bf16.msra.mxu0 %v506
    %694 = vmatprep.subr.bf16.mxu0 0
    %695 = vmatpush1.bf16.msra.mxu0 %v507
    %696 = vmatprep.subr.bf16.mxu0 0
    %697 = vmatpush1.bf16.msra.mxu0 %v508
    %698 = vmatprep.subr.bf16.mxu0 0
    %699 = vmatpush1.bf16.msra.mxu0 %v509
    %700 = vmatprep.subr.bf16.mxu0 0
    %701 = vmatpush1.bf16.msra.mxu0 %v510
    %702 = vmatprep.subr.bf16.mxu0 0
    %703 = vmatpush1.bf16.msra.mxu0 %v511
    %704 = vmatprep.mubr.bf16.mxu0 %v197
    %705 = vmatmul.mubr.bf16.gmra.mrb[0].mxu0 %v196
    %v706 = vpop.f32.mrb[0].mxu0
    %v707 = vadd.f32 %v667, %v706
    %v708 = vpop.f32.mrb[0].mxu0
    %v709 = vpop.f32.mrb[0].mxu0
    %v710 = vpop.f32.mrb[0].mxu0
    %711 = vdwg.mxu0
    %712 = vmatprep.subr.bf16.mxu0 0
    %713 = vmatpush1.bf16.msra.mxu0 %v512
    %714 = vmatprep.subr.bf16.mxu0 0
    %715 = vmatpush1.bf16.msra.mxu0 %v513
    %716 = vmatprep.subr.bf16.mxu0 0
    %717 = vmatpush1.bf16.msra.mxu0 %v514
    %718 = vmatprep.subr.bf16.mxu0 0
    %719 = vmatpush1.bf16.msra.mxu0 %v515
    %720 = vmatprep.subr.bf16.mxu0 0
    %721 = vmatpush1.bf16.msra.mxu0 %v516
    %722 = vmatprep.subr.bf16.mxu0 0
    %723 = vmatpush1.bf16.msra.mxu0 %v517
    %724 = vmatprep.subr.bf16.mxu0 0
    %725 = vmatpush1.bf16.msra.mxu0 %v518
    %726 = vmatprep.subr.bf16.mxu0 0
    %727 = vmatpush1.bf16.msra.mxu0 %v519
    %728 = vmatprep.subr.bf16.mxu0 0
    %729 = vmatpush1.bf16.msra.mxu0 %v520
    %730 = vmatprep.subr.bf16.mxu0 0
    %731 = vmatpush1.bf16.msra.mxu0 %v521
    %732 = vmatprep.subr.bf16.mxu0 0
    %733 = vmatpush1.bf16.msra.mxu0 %v522
    %734 = vmatprep.subr.bf16.mxu0 0
    %735 = vmatpush1.bf16.msra.mxu0 %v523
    %736 = vmatprep.subr.bf16.mxu0 0
    %737 = vmatpush1.bf16.msra.mxu0 %v524
    %738 = vmatprep.subr.bf16.mxu0 0
    %739 = vmatpush1.bf16.msra.mxu0 %v525
    %740 = vmatprep.subr.bf16.mxu0 0
    %741 = vmatpush1.bf16.msra.mxu0 %v526
    %742 = vmatprep.subr.bf16.mxu0 0
    %743 = vmatpush1.bf16.msra.mxu0 %v527
    %744 = vmatprep.mubr.bf16.mxu0 %v199
    %745 = vmatmul.mubr.bf16.gmra.mrb[0].mxu0 %v198
    %v746 = vpop.f32.mrb[0].mxu0
    %v747 = vadd.f32 %v707, %v746
    %v748 = vpop.f32.mrb[0].mxu0
    %v749 = vpop.f32.mrb[0].mxu0
    %v750 = vpop.f32.mrb[0].mxu0
    %751 = vdwg.mxu0
    %v752 = vmax.f32 %v747, 0.0
    %v753 = vpack.c.bf16 %v752, %v752
    %v754 = vld [vmem:[%s4] sm:$0xff]
    %v755 = vld [vmem:[%s4 + $0x8] sm:$0xff]
    %v756 = vld [vmem:[%s4 + $0x10] sm:$0xff]
    %v757 = vld [vmem:[%s4 + $0x18] sm:$0xff]
    %v758 = vld [vmem:[%s5] sm:$0x3]
    %v760 = vlaneseq
    %v761 = vshrl.u32 %v760, 7
    %v762 = vsub.s32 0, %v761
    %v763 = vrot.slane %v758, %v762
    %v764 = vlaneseq
    %v765 = vshrl.u32 %v764, 7
    %v766 = vsub.s32 1, %v765
    %v767 = vrot.slane %v758, %v766
    %v774 = vunpack.c.l.b16 %v754
    %v775 = vunpack.c.h.b16 %v754
    %v776 = vunpack.c.l.b16 %v755
    %v777 = vunpack.c.h.b16 %v755
    %v778 = vunpack.c.l.b16 %v756
    %v779 = vunpack.c.h.b16 %v756
    %v780 = vunpack.c.l.b16 %v757
    %v781 = vunpack.c.h.b16 %v757
    %v782 = vpack.c.b16 %v776, %v774
    %v783 = vpack.c.b16 %v777, %v775
    %v784 = vpack.c.b16 %v780, %v778
    %v785 = vpack.c.b16 %v781, %v779
    %vm790 = vcmask 261120
    %v792 = vsel %vm790, %v753, 0
    %794 = vmatprep.subr.bf16.mxu0 %v783
    %795 = vmatpush1.bf16.msra.mxu0 %v782
    %796 = vmatprep.subr.bf16.mxu0 %v785
    %797 = vmatpush1.bf16.msra.mxu0 %v784
    %798 = vmatprep.subr.bf16.mxu0 0
    %799 = vmatpush1.bf16.msra.mxu0 0
    %800 = vmatprep.subr.bf16.mxu0 0
    %801 = vmatpush1.bf16.msra.mxu0 0
    %802 = vmatprep.subr.bf16.mxu0 0
    %803 = vmatpush1.bf16.msra.mxu0 0
    %804 = vmatprep.subr.bf16.mxu0 0
    %805 = vmatpush1.bf16.msra.mxu0 0
    %806 = vmatprep.subr.bf16.mxu0 0
    %807 = vmatpush1.bf16.msra.mxu0 0
    %808 = vmatprep.subr.bf16.mxu0 0
    %809 = vmatpush1.bf16.msra.mxu0 0
    %810 = vmatprep.subr.bf16.mxu0 0
    %811 = vmatpush1.bf16.msra.mxu0 0
    %812 = vmatprep.subr.bf16.mxu0 0
    %813 = vmatpush1.bf16.msra.mxu0 0
    %814 = vmatprep.subr.bf16.mxu0 0
    %815 = vmatpush1.bf16.msra.mxu0 0
    %816 = vmatprep.subr.bf16.mxu0 0
    %817 = vmatpush1.bf16.msra.mxu0 0
    %818 = vmatprep.subr.bf16.mxu0 0
    %819 = vmatpush1.bf16.msra.mxu0 0
    %820 = vmatprep.subr.bf16.mxu0 0
    %821 = vmatpush1.bf16.msra.mxu0 0
    %822 = vmatprep.subr.bf16.mxu0 0
    %823 = vmatpush1.bf16.msra.mxu0 0
    %824 = vmatprep.subr.bf16.mxu0 0
    %825 = vmatpush1.bf16.msra.mxu0 0
    %826 = vmatprep.mubr.bf16.mxu0 0
    %827 = vmatmul.mubr.bf16.gmra.mrb[0].mxu0 %v792
    %v828 = vpop.f32.mrb[0].mxu0
    %v829 = vadd.f32 %v763, %v828
    %v830 = vpop.f32.mrb[0].mxu0
    %v831 = vadd.f32 %v767, %v830
    %v832 = vpop.f32.mrb[0].mxu0
    %v833 = vpop.f32.mrb[0].mxu0
    %834 = vdwg.mxu0
    %v835 = vmul.f32 %v831, 0.5
    %v836 = vmul.f32 %v835, 1.442695
    %v837 = vpow.pop %v836
    %v838 = vmul.f32 %v44, %v837
    %v839 = vadd.f32 %v829, %v838
    %v840 = vpack.c.bf16 %v839, %v839
    %v841 = vld [vmem:[%s6] sm:$0xf]
    %v842 = vld [vmem:[%s6 + $0x4] sm:$0xf]
    %v843 = vld [vmem:[%s6 + $0x8] sm:$0xf]
    %v844 = vld [vmem:[%s6 + $0xc] sm:$0xf]
    %v845 = vld [vmem:[%s6 + $0x10] sm:$0xf]
    %v846 = vld [vmem:[%s6 + $0x14] sm:$0xf]
    %v847 = vld [vmem:[%s6 + $0x18] sm:$0xf]
    %v848 = vld [vmem:[%s6 + $0x1c] sm:$0xf]
    %v849 = vld [vmem:[%s6 + $0x20] sm:$0xf]
    %v850 = vld [vmem:[%s6 + $0x24] sm:$0xf]
    %v851 = vld [vmem:[%s6 + $0x28] sm:$0xf]
    %v852 = vld [vmem:[%s6 + $0x2c] sm:$0xf]
    %v853 = vld [vmem:[%s6 + $0x30] sm:$0xf]
    %v854 = vld [vmem:[%s6 + $0x34] sm:$0xf]
    %v855 = vld [vmem:[%s6 + $0x38] sm:$0xf]
    %v856 = vld [vmem:[%s6 + $0x3c] sm:$0xf]
    %v857 = vld [vmem:[%s7] sm:$0x1]
    %v859 = vlaneseq
    %v860 = vshrl.u32 %v859, 7
    %v861 = vsub.s32 0, %v860
    %v862 = vrot.slane %v857, %v861
    %v880 = vunpack.c.l.b16 %v841
    %v881 = vunpack.c.l.b16 %v842
    %v882 = vunpack.c.l.b16 %v843
    %v883 = vunpack.c.l.b16 %v844
    %v884 = vunpack.c.l.b16 %v845
    %v885 = vunpack.c.l.b16 %v846
    %v886 = vunpack.c.l.b16 %v847
    %v887 = vunpack.c.l.b16 %v848
    %v888 = vunpack.c.l.b16 %v849
    %v889 = vunpack.c.l.b16 %v850
    %v890 = vunpack.c.l.b16 %v851
    %v891 = vunpack.c.l.b16 %v852
    %v892 = vunpack.c.l.b16 %v853
    %v893 = vunpack.c.l.b16 %v854
    %v894 = vunpack.c.l.b16 %v855
    %v895 = vunpack.c.l.b16 %v856
    %v896 = vpack.c.b16 %v881, %v880
    %v897 = vpack.c.b16 %v883, %v882
    %v898 = vpack.c.b16 %v885, %v884
    %v899 = vpack.c.b16 %v887, %v886
    %v900 = vpack.c.b16 %v889, %v888
    %v901 = vpack.c.b16 %v891, %v890
    %v902 = vpack.c.b16 %v893, %v892
    %v903 = vpack.c.b16 %v895, %v894
    %912 = vmatprep.subr.bf16.mxu0 0
    %913 = vmatpush1.bf16.msra.mxu0 %v896
    %914 = vmatprep.subr.bf16.mxu0 0
    %915 = vmatpush1.bf16.msra.mxu0 %v897
    %916 = vmatprep.subr.bf16.mxu0 0
    %917 = vmatpush1.bf16.msra.mxu0 %v898
    %918 = vmatprep.subr.bf16.mxu0 0
    %919 = vmatpush1.bf16.msra.mxu0 %v899
    %920 = vmatprep.subr.bf16.mxu0 0
    %921 = vmatpush1.bf16.msra.mxu0 %v900
    %922 = vmatprep.subr.bf16.mxu0 0
    %923 = vmatpush1.bf16.msra.mxu0 %v901
    %924 = vmatprep.subr.bf16.mxu0 0
    %925 = vmatpush1.bf16.msra.mxu0 %v902
    %926 = vmatprep.subr.bf16.mxu0 0
    %927 = vmatpush1.bf16.msra.mxu0 %v903
    %928 = vmatprep.subr.bf16.mxu0 0
    %929 = vmatpush1.bf16.msra.mxu0 0
    %930 = vmatprep.subr.bf16.mxu0 0
    %931 = vmatpush1.bf16.msra.mxu0 0
    %932 = vmatprep.subr.bf16.mxu0 0
    %933 = vmatpush1.bf16.msra.mxu0 0
    %934 = vmatprep.subr.bf16.mxu0 0
    %935 = vmatpush1.bf16.msra.mxu0 0
    %936 = vmatprep.subr.bf16.mxu0 0
    %937 = vmatpush1.bf16.msra.mxu0 0
    %938 = vmatprep.subr.bf16.mxu0 0
    %939 = vmatpush1.bf16.msra.mxu0 0
    %940 = vmatprep.subr.bf16.mxu0 0
    %941 = vmatpush1.bf16.msra.mxu0 0
    %942 = vmatprep.subr.bf16.mxu0 0
    %943 = vmatpush1.bf16.msra.mxu0 0
    %944 = vmatprep.mubr.bf16.mxu0 0
    %945 = vmatmul.mubr.bf16.gmra.mrb[0].mxu0 %v840
    %v946 = vpop.f32.mrb[0].mxu0
    %v947 = vadd.f32 %v862, %v946
    %v948 = vpop.f32.mrb[0].mxu0
    %v949 = vpop.f32.mrb[0].mxu0
    %v950 = vpop.f32.mrb[0].mxu0
    %951 = vdwg.mxu0
    %v952 = vmax.f32 %v947, 0.0
    %v953 = vpack.c.bf16 %v952, %v952
    %v954 = vld [vmem:[%s8] sm:$0xff]
    %v955 = vld [vmem:[%s8 + $0x8] sm:$0xff]
    %v956 = vld [vmem:[%s8 + $0x10] sm:$0xff]
    %v957 = vld [vmem:[%s8 + $0x18] sm:$0xff]
    %v958 = vld [vmem:[%s8 + $0x20] sm:$0xff]
    %v959 = vld [vmem:[%s8 + $0x28] sm:$0xff]
    %v960 = vld [vmem:[%s8 + $0x30] sm:$0xff]
    %v961 = vld [vmem:[%s8 + $0x38] sm:$0xff]
    %v962 = vld [vmem:[%s8 + $0x40] sm:$0xff]
    %v963 = vld [vmem:[%s8 + $0x48] sm:$0xff]
    %v964 = vld [vmem:[%s8 + $0x50] sm:$0xff]
    %v965 = vld [vmem:[%s8 + $0x58] sm:$0xff]
    %v966 = vld [vmem:[%s8 + $0x60] sm:$0xff]
    %v967 = vld [vmem:[%s8 + $0x68] sm:$0xff]
    %v968 = vld [vmem:[%s8 + $0x70] sm:$0xff]
    %v969 = vld [vmem:[%s8 + $0x78] sm:$0xff]
    %v970 = vld [vmem:[%s9] sm:$0xff]
    %v972 = vlaneseq
    %v973 = vshrl.u32 %v972, 7
    %v974 = vsub.s32 0, %v973
    %v975 = vrot.slane %v970, %v974
    %v976 = vlaneseq
    %v977 = vshrl.u32 %v976, 7
    %v978 = vsub.s32 1, %v977
    %v979 = vrot.slane %v970, %v978
    %v980 = vlaneseq
    %v981 = vshrl.u32 %v980, 7
    %v982 = vsub.s32 2, %v981
    %v983 = vrot.slane %v970, %v982
    %v984 = vlaneseq
    %v985 = vshrl.u32 %v984, 7
    %v986 = vsub.s32 3, %v985
    %v987 = vrot.slane %v970, %v986
    %v988 = vlaneseq
    %v989 = vshrl.u32 %v988, 7
    %v990 = vsub.s32 4, %v989
    %v991 = vrot.slane %v970, %v990
    %v992 = vlaneseq
    %v993 = vshrl.u32 %v992, 7
    %v994 = vsub.s32 5, %v993
    %v995 = vrot.slane %v970, %v994
    %v996 = vlaneseq
    %v997 = vshrl.u32 %v996, 7
    %v998 = vsub.s32 6, %v997
    %v999 = vrot.slane %v970, %v998
    %v1000 = vlaneseq
    %v1001 = vshrl.u32 %v1000, 7
    %v1002 = vsub.s32 7, %v1001
    %v1003 = vrot.slane %v970, %v1002
    %v1028 = vunpack.c.l.b16 %v954
    %v1029 = vunpack.c.h.b16 %v954
    %v1030 = vunpack.c.l.b16 %v955
    %v1031 = vunpack.c.h.b16 %v955
    %v1032 = vunpack.c.l.b16 %v956
    %v1033 = vunpack.c.h.b16 %v956
    %v1034 = vunpack.c.l.b16 %v957
    %v1035 = vunpack.c.h.b16 %v957
    %v1036 = vunpack.c.l.b16 %v958
    %v1037 = vunpack.c.h.b16 %v958
    %v1038 = vunpack.c.l.b16 %v959
    %v1039 = vunpack.c.h.b16 %v959
    %v1040 = vunpack.c.l.b16 %v960
    %v1041 = vunpack.c.h.b16 %v960
    %v1042 = vunpack.c.l.b16 %v961
    %v1043 = vunpack.c.h.b16 %v961
    %v1044 = vunpack.c.l.b16 %v962
    %v1045 = vunpack.c.h.b16 %v962
    %v1046 = vunpack.c.l.b16 %v963
    %v1047 = vunpack.c.h.b16 %v963
    %v1048 = vunpack.c.l.b16 %v964
    %v1049 = vunpack.c.h.b16 %v964
    %v1050 = vunpack.c.l.b16 %v965
    %v1051 = vunpack.c.h.b16 %v965
    %v1052 = vunpack.c.l.b16 %v966
    %v1053 = vunpack.c.h.b16 %v966
    %v1054 = vunpack.c.l.b16 %v967
    %v1055 = vunpack.c.h.b16 %v967
    %v1056 = vunpack.c.l.b16 %v968
    %v1057 = vunpack.c.h.b16 %v968
    %v1058 = vunpack.c.l.b16 %v969
    %v1059 = vunpack.c.h.b16 %v969
    %v1060 = vpack.c.b16 %v1036, %v1028
    %v1061 = vpack.c.b16 %v1037, %v1029
    %v1062 = vpack.c.b16 %v1038, %v1030
    %v1063 = vpack.c.b16 %v1039, %v1031
    %v1064 = vpack.c.b16 %v1040, %v1032
    %v1065 = vpack.c.b16 %v1041, %v1033
    %v1066 = vpack.c.b16 %v1042, %v1034
    %v1067 = vpack.c.b16 %v1043, %v1035
    %v1068 = vpack.c.b16 %v1052, %v1044
    %v1069 = vpack.c.b16 %v1053, %v1045
    %v1070 = vpack.c.b16 %v1054, %v1046
    %v1071 = vpack.c.b16 %v1055, %v1047
    %v1072 = vpack.c.b16 %v1056, %v1048
    %v1073 = vpack.c.b16 %v1057, %v1049
    %v1074 = vpack.c.b16 %v1058, %v1050
    %v1075 = vpack.c.b16 %v1059, %v1051
    %v1093 = vsel %vm790, %v953, 0
    %1095 = vmatprep.subr.bf16.mxu0 %v1061
    %1096 = vmatpush1.bf16.msra.mxu0 %v1060
    %1097 = vmatprep.subr.bf16.mxu0 %v1069
    %1098 = vmatpush1.bf16.msra.mxu0 %v1068
    %1099 = vmatprep.subr.bf16.mxu0 0
    %1100 = vmatpush1.bf16.msra.mxu0 0
    %1101 = vmatprep.subr.bf16.mxu0 0
    %1102 = vmatpush1.bf16.msra.mxu0 0
    %1103 = vmatprep.subr.bf16.mxu0 0
    %1104 = vmatpush1.bf16.msra.mxu0 0
    %1105 = vmatprep.subr.bf16.mxu0 0
    %1106 = vmatpush1.bf16.msra.mxu0 0
    %1107 = vmatprep.subr.bf16.mxu0 0
    %1108 = vmatpush1.bf16.msra.mxu0 0
    %1109 = vmatprep.subr.bf16.mxu0 0
    %1110 = vmatpush1.bf16.msra.mxu0 0
    %1111 = vmatprep.subr.bf16.mxu0 0
    %1112 = vmatpush1.bf16.msra.mxu0 0
    %1113 = vmatprep.subr.bf16.mxu0 0
    %1114 = vmatpush1.bf16.msra.mxu0 0
    %1115 = vmatprep.subr.bf16.mxu0 0
    %1116 = vmatpush1.bf16.msra.mxu0 0
    %1117 = vmatprep.subr.bf16.mxu0 0
    %1118 = vmatpush1.bf16.msra.mxu0 0
    %1119 = vmatprep.subr.bf16.mxu0 0
    %1120 = vmatpush1.bf16.msra.mxu0 0
    %1121 = vmatprep.subr.bf16.mxu0 0
    %1122 = vmatpush1.bf16.msra.mxu0 0
    %1123 = vmatprep.subr.bf16.mxu0 0
    %1124 = vmatpush1.bf16.msra.mxu0 0
    %1125 = vmatprep.subr.bf16.mxu0 0
    %1126 = vmatpush1.bf16.msra.mxu0 0
    %1127 = vmatprep.mubr.bf16.mxu0 0
    %1128 = vmatmul.mubr.bf16.gmra.mrb[0].mxu0 %v1093
    %v1129 = vpop.f32.mrb[0].mxu0
    %v1130 = vadd.f32 %v975, %v1129
    %v1131 = vpop.f32.mrb[0].mxu0
    %v1132 = vadd.f32 %v979, %v1131
    %v1133 = vpop.f32.mrb[0].mxu0
    %v1134 = vpop.f32.mrb[0].mxu0
    %1135 = vdwg.mxu0
    %1136 = vmatprep.subr.bf16.mxu0 %v1063
    %1137 = vmatpush1.bf16.msra.mxu0 %v1062
    %1138 = vmatprep.subr.bf16.mxu0 %v1071
    %1139 = vmatpush1.bf16.msra.mxu0 %v1070
    %1140 = vmatprep.subr.bf16.mxu0 0
    %1141 = vmatpush1.bf16.msra.mxu0 0
    %1142 = vmatprep.subr.bf16.mxu0 0
    %1143 = vmatpush1.bf16.msra.mxu0 0
    %1144 = vmatprep.subr.bf16.mxu0 0
    %1145 = vmatpush1.bf16.msra.mxu0 0
    %1146 = vmatprep.subr.bf16.mxu0 0
    %1147 = vmatpush1.bf16.msra.mxu0 0
    %1148 = vmatprep.subr.bf16.mxu0 0
    %1149 = vmatpush1.bf16.msra.mxu0 0
    %1150 = vmatprep.subr.bf16.mxu0 0
    %1151 = vmatpush1.bf16.msra.mxu0 0
    %1152 = vmatprep.subr.bf16.mxu0 0
    %1153 = vmatpush1.bf16.msra.mxu0 0
    %1154 = vmatprep.subr.bf16.mxu0 0
    %1155 = vmatpush1.bf16.msra.mxu0 0
    %1156 = vmatprep.subr.bf16.mxu0 0
    %1157 = vmatpush1.bf16.msra.mxu0 0
    %1158 = vmatprep.subr.bf16.mxu0 0
    %1159 = vmatpush1.bf16.msra.mxu0 0
    %1160 = vmatprep.subr.bf16.mxu0 0
    %1161 = vmatpush1.bf16.msra.mxu0 0
    %1162 = vmatprep.subr.bf16.mxu0 0
    %1163 = vmatpush1.bf16.msra.mxu0 0
    %1164 = vmatprep.subr.bf16.mxu0 0
    %1165 = vmatpush1.bf16.msra.mxu0 0
    %1166 = vmatprep.subr.bf16.mxu0 0
    %1167 = vmatpush1.bf16.msra.mxu0 0
    %1168 = vmatprep.mubr.bf16.mxu0 0
    %1169 = vmatmul.mubr.bf16.gmra.mrb[0].mxu0 %v1093
    %v1170 = vpop.f32.mrb[0].mxu0
    %v1171 = vadd.f32 %v983, %v1170
    %v1172 = vpop.f32.mrb[0].mxu0
    %v1173 = vadd.f32 %v987, %v1172
    %v1174 = vpop.f32.mrb[0].mxu0
    %v1175 = vpop.f32.mrb[0].mxu0
    %1176 = vdwg.mxu0
    %1177 = vmatprep.subr.bf16.mxu0 %v1065
    %1178 = vmatpush1.bf16.msra.mxu0 %v1064
    %1179 = vmatprep.subr.bf16.mxu0 %v1073
    %1180 = vmatpush1.bf16.msra.mxu0 %v1072
    %1181 = vmatprep.subr.bf16.mxu0 0
    %1182 = vmatpush1.bf16.msra.mxu0 0
    %1183 = vmatprep.subr.bf16.mxu0 0
    %1184 = vmatpush1.bf16.msra.mxu0 0
    %1185 = vmatprep.subr.bf16.mxu0 0
    %1186 = vmatpush1.bf16.msra.mxu0 0
    %1187 = vmatprep.subr.bf16.mxu0 0
    %1188 = vmatpush1.bf16.msra.mxu0 0
    %1189 = vmatprep.subr.bf16.mxu0 0
    %1190 = vmatpush1.bf16.msra.mxu0 0
    %1191 = vmatprep.subr.bf16.mxu0 0
    %1192 = vmatpush1.bf16.msra.mxu0 0
    %1193 = vmatprep.subr.bf16.mxu0 0
    %1194 = vmatpush1.bf16.msra.mxu0 0
    %1195 = vmatprep.subr.bf16.mxu0 0
    %1196 = vmatpush1.bf16.msra.mxu0 0
    %1197 = vmatprep.subr.bf16.mxu0 0
    %1198 = vmatpush1.bf16.msra.mxu0 0
    %1199 = vmatprep.subr.bf16.mxu0 0
    %1200 = vmatpush1.bf16.msra.mxu0 0
    %1201 = vmatprep.subr.bf16.mxu0 0
    %1202 = vmatpush1.bf16.msra.mxu0 0
    %1203 = vmatprep.subr.bf16.mxu0 0
    %1204 = vmatpush1.bf16.msra.mxu0 0
    %1205 = vmatprep.subr.bf16.mxu0 0
    %1206 = vmatpush1.bf16.msra.mxu0 0
    %1207 = vmatprep.subr.bf16.mxu0 0
    %1208 = vmatpush1.bf16.msra.mxu0 0
    %1209 = vmatprep.mubr.bf16.mxu0 0
    %1210 = vmatmul.mubr.bf16.gmra.mrb[0].mxu0 %v1093
    %v1211 = vpop.f32.mrb[0].mxu0
    %v1212 = vadd.f32 %v991, %v1211
    %v1213 = vpop.f32.mrb[0].mxu0
    %v1214 = vadd.f32 %v995, %v1213
    %v1215 = vpop.f32.mrb[0].mxu0
    %v1216 = vpop.f32.mrb[0].mxu0
    %1217 = vdwg.mxu0
    %1218 = vmatprep.subr.bf16.mxu0 %v1067
    %1219 = vmatpush1.bf16.msra.mxu0 %v1066
    %1220 = vmatprep.subr.bf16.mxu0 %v1075
    %1221 = vmatpush1.bf16.msra.mxu0 %v1074
    %1222 = vmatprep.subr.bf16.mxu0 0
    %1223 = vmatpush1.bf16.msra.mxu0 0
    %1224 = vmatprep.subr.bf16.mxu0 0
    %1225 = vmatpush1.bf16.msra.mxu0 0
    %1226 = vmatprep.subr.bf16.mxu0 0
    %1227 = vmatpush1.bf16.msra.mxu0 0
    %1228 = vmatprep.subr.bf16.mxu0 0
    %1229 = vmatpush1.bf16.msra.mxu0 0
    %1230 = vmatprep.subr.bf16.mxu0 0
    %1231 = vmatpush1.bf16.msra.mxu0 0
    %1232 = vmatprep.subr.bf16.mxu0 0
    %1233 = vmatpush1.bf16.msra.mxu0 0
    %1234 = vmatprep.subr.bf16.mxu0 0
    %1235 = vmatpush1.bf16.msra.mxu0 0
    %1236 = vmatprep.subr.bf16.mxu0 0
    %1237 = vmatpush1.bf16.msra.mxu0 0
    %1238 = vmatprep.subr.bf16.mxu0 0
    %1239 = vmatpush1.bf16.msra.mxu0 0
    %1240 = vmatprep.subr.bf16.mxu0 0
    %1241 = vmatpush1.bf16.msra.mxu0 0
    %1242 = vmatprep.subr.bf16.mxu0 0
    %1243 = vmatpush1.bf16.msra.mxu0 0
    %1244 = vmatprep.subr.bf16.mxu0 0
    %1245 = vmatpush1.bf16.msra.mxu0 0
    %1246 = vmatprep.subr.bf16.mxu0 0
    %1247 = vmatpush1.bf16.msra.mxu0 0
    %1248 = vmatprep.subr.bf16.mxu0 0
    %1249 = vmatpush1.bf16.msra.mxu0 0
    %1250 = vmatprep.mubr.bf16.mxu0 0
    %1251 = vmatmul.mubr.bf16.gmra.mrb[0].mxu0 %v1093
    %v1252 = vpop.f32.mrb[0].mxu0
    %v1253 = vadd.f32 %v999, %v1252
    %v1254 = vpop.f32.mrb[0].mxu0
    %v1255 = vadd.f32 %v1003, %v1254
    %v1256 = vpop.f32.mrb[0].mxu0
    %v1257 = vpop.f32.mrb[0].mxu0
    %1258 = vdwg.mxu0
    %v1259 = vpack.c.bf16 %v1130, %v1130
    %v1260 = vpack.c.bf16 %v1132, %v1132
    %v1261 = vpack.c.bf16 %v1171, %v1171
    %v1262 = vpack.c.bf16 %v1173, %v1173
    %v1263 = vpack.c.bf16 %v1212, %v1212
    %v1264 = vpack.c.bf16 %v1214, %v1214
    %v1265 = vpack.c.bf16 %v1253, %v1253
    %v1266 = vpack.c.bf16 %v1255, %v1255
    %v1275 = vunpack.c.l.b16 %v1259
    %v1276 = vunpack.c.l.b16 %v1260
    %v1277 = vunpack.c.l.b16 %v1261
    %v1278 = vunpack.c.l.b16 %v1262
    %v1279 = vunpack.c.l.b16 %v1263
    %v1280 = vunpack.c.l.b16 %v1264
    %v1281 = vunpack.c.l.b16 %v1265
    %v1282 = vunpack.c.l.b16 %v1266
    %v1283 = vpack.c.b16 %v1276, %v1275
    %v1284 = vpack.c.b16 %v1278, %v1277
    %v1285 = vpack.c.b16 %v1280, %v1279
    %v1286 = vpack.c.b16 %v1282, %v1281
    %1291 = vst [vmem:[#allocation2] sm:$0xff] %v1283
    %1292 = vst [vmem:[#allocation2 + $0x8] sm:$0xff] %v1284
    %1293 = vst [vmem:[#allocation2 + $0x10] sm:$0xff] %v1285
    %1294 = vst [vmem:[#allocation2 + $0x18] sm:$0xff] %v1286
    %1295 = vst [vmem:[#allocation4] sm:$0xff] %v829
    %1296 = vst [vmem:[#allocation4 + $0x8] sm:$0xff] %v831
    %1297 = vst [vmem:[#allocation4 + $0x10] sm:$0xff] %v839
    // Predicated region
    $region42: #{tpu_custom_call.1} parent=1 // pred_check
      _
    $region43: #{tpu_custom_call.1} parent=1 // pred_check_branch
      %1299 = sbr.rel (0) target = $region45
    $region44: #{tpu_custom_call.1} parent=1 // pred_region
      %s1301 = ssub.s32 512, 512
      %1302 = vsyncadd [#allocation3], %s1301
      %s1304 = sshll.u32 [#allocation2], 4
      %s1305 = int_to_ptr.vmem [resolvable:$true] %s1304
      %1307 = dma.vmem_to_hbm [thread:$0]  %s1305, 512, %s10, [#allocation3]
    $region45: #{tpu_custom_call.1} parent=1 // pred_fallthru
      _
    // Predicated region
    $region46: #{tpu_custom_call.1} parent=1 // pred_check
      _
    $region47: #{tpu_custom_call.1} parent=1 // pred_check_branch
      %1309 = sbr.rel (0) target = $region49
    $region48: #{tpu_custom_call.1} parent=1 // pred_region
      %s1311 = ssub.s32 384, 384
      %1312 = vsyncadd [#allocation5], %s1311
      %s1314 = sshll.u32 [#allocation4], 4
      %s1315 = int_to_ptr.vmem [resolvable:$true] %s1314
      %1317 = dma.vmem_to_hbm [thread:$0]  %s1315, 384, %s11, [#allocation5]
    $region49: #{tpu_custom_call.1} parent=1 // pred_fallthru
      _
    // Predicated region
    $region50: #{tpu_custom_call.1} parent=1 // pred_check
      _
    $region51: #{tpu_custom_call.1} parent=1 // pred_check_branch
      %1319 = sbr.rel (0) target = $region53
    $region52: #{tpu_custom_call.1} parent=1 // pred_region
      %1320 = dma.done [#allocation3], 512
    $region53: #{tpu_custom_call.1} parent=1 // pred_fallthru
      _
    // Predicated region
    $region54: #{tpu_custom_call.1} parent=1 // pred_check
      _
    $region55: #{tpu_custom_call.1} parent=1 // pred_check_branch
      %1322 = sbr.rel (0) target = $region57
    $region56: #{tpu_custom_call.1} parent=1 // pred_region
      %1323 = dma.done [#allocation5], 384
    $region57: #{tpu_custom_call.1} parent=1 // pred_fallthru
      _
    %1324 = vsyncpa [#allocation3], 1
    %1325 = vsyncpa [#allocation5], 1

</llo_original>
